<compile_context>
chip_gen: v6e
topology: v6e:2x2x1
jax: 0.10.0
libtpu: 0.0.40
codegen_flags: <defaults>
</compile_context>

<pallas_src>
import jax
import jax.numpy as jnp
from jax import lax
from jax.experimental import pallas as pl
from jax.experimental.pallas import tpu as pltpu


def _round_up(x, m):
    return (x + m - 1) // m * m


def _choose_tile(n, tn_request):
    """Pick a lane-dense (x128) output tile width and padded column count.

    Small N -> a single tile per layer (per-grid-step overhead ~0.35us, do not
    split tiny outputs).  Otherwise prefer an even tile count so v7x's two
    TensorCores stay balanced on the 'parallel' tile axis.
    """
    n128 = _round_up(n, 128)
    tn = min(_round_up(tn_request, 128), n128)
    n_tiles = -(-n128 // tn)
    if n_tiles > 1 and n_tiles % 2 == 1:
        n_tiles += 1
        tn = _round_up(-(-n // n_tiles), 128)
        n_tiles = -(-n128 // tn)
    return tn, n_tiles * tn


def coda_prompt_kernel(aqk_ref, p_ref, o_ref):
    # aqk_ref: (1, Bp, Kpp) bf16 -- per-layer attention weights, VMEM-resident
    #                               across the tile axis (constant index_map in j)
    # p_ref  : (1, Kpp, TN) bf16 -- streamed prompt-pool tile (auto double-buffered)
    # o_ref  : (1, Bp, TN)  bf16 -- lane-dense output tile; f32 MXU accumulation
    o_ref[0] = jnp.dot(aqk_ref[0], p_ref[0],
                       preferred_element_type=jnp.float32).astype(o_ref.dtype)


def prepare_coda_inference(K, A, p, *, tn=2048):
    """Parameter-only precompute.  Run once per task switch / parameter update.

    K, A: (Layers, Kp, D) f32; p: (Layers, Kp, L, E) f32 -- already sliced to the
    eval-mode active pool K[:f], A[:f], p[:f] by the caller.
    """
    eps = 1e-12
    Lyr, Kp, D = K.shape
    _, _, L_len, E = p.shape
    N = L_len * E

    k_norm = jnp.sqrt(jnp.sum(K * K, axis=-1, keepdims=True))
    n_K = K / jnp.maximum(k_norm, eps)
    W1 = (A * n_K).astype(jnp.float32)          # numerator weights   (f32, small)
    W2 = (A * A).astype(jnp.float32)            # squared-norm weights (f32, small)

    Kpp = _round_up(Kp, 8)
    tile_n, Np = _choose_tile(N, tn)

    # Padded bf16 prompt pool: the only large array the kernel streams.
    p_flat = p.reshape(Lyr, Kp, N).astype(jnp.float32)
    p_b = (jnp.zeros((Lyr, Kpp, Np), jnp.float32)
           .at[:, :Kp, :N].set(p_flat)
           .astype(jnp.bfloat16))

    return {
        "w1": W1, "w2": W2, "p_b": p_b,
        "kp": Kp, "kpp": Kpp, "l_len": L_len, "e": E,
        "n": N, "np": Np, "tn": tile_n, "layers": Lyr,
    }


def coda_prompt_forward(x_querry, prepared, x_block):
    """Fused equivalent of CodaPrompt.forward(x_querry, l, x_block, train=False)
    for ALL e_layers at once.  Returns ([Ek, Ev], loss, x_block) where Ek/Ev carry
    a leading layer axis."""
    eps = 1e-12
    W1, W2, p_b = prepared["w1"], prepared["w2"], prepared["p_b"]
    Kp, Kpp = prepared["kp"], prepared["kpp"]
    L_len, E = prepared["l_len"], prepared["e"]
    N, Np, tn, Lyr = prepared["n"], prepared["np"], prepared["tn"], prepared["layers"]

    B = x_querry.shape[0]
    Bp = _round_up(B, 8)

    # ---- tiny per-query work, kept in f32 (accuracy) -------------------------
    x32 = x_querry.astype(jnp.float32)
    num = jnp.einsum("bd,lkd->lbk", x32, W1)
    den2 = jnp.einsum("bd,lkd->lbk", x32 * x32, W2)
    aq_k = num * lax.rsqrt(jnp.maximum(den2, eps * eps))
    aqk_b = (jnp.zeros((Lyr, Bp, Kpp), jnp.float32)
             .at[:, :B, :Kp].set(aq_k)
             .astype(jnp.bfloat16))

    # ---- streamed prompt matmul (the mem-bound part) -------------------------
    grid = (Lyr, Np // tn)
    bytes_accessed = Lyr * (Kpp * Np * 2 + Bp * Kpp * 2 + Bp * Np * 2)
    flops = 2 * Lyr * Bp * Kpp * Np
    vmem_need = 2 * (Kpp * tn + Bp * tn + Bp * Kpp) * 2   # double-buffered bf16 blocks
    vmem_limit = int(min(max(2 * vmem_need, 32 * 1024 * 1024), 64 * 1024 * 1024))

    out = pl.pallas_call(
        coda_prompt_kernel,
        out_shape=jax.ShapeDtypeStruct((Lyr, Bp, Np), jnp.bfloat16),
        grid=grid,
        in_specs=[
            pl.BlockSpec((1, Bp, Kpp), lambda l, j: (l, 0, 0)),   # aq_k (resident per layer)
            pl.BlockSpec((1, Kpp, tn), lambda l, j: (l, 0, j)),   # p tile (streamed bf16)
        ],
        out_specs=pl.BlockSpec((1, Bp, tn), lambda l, j: (l, 0, j)),
        compiler_params=pltpu.CompilerParams(
            dimension_semantics=("parallel", "parallel"),
            vmem_limit_bytes=vmem_limit,
        ),
        cost_estimate=pl.CostEstimate(
            flops=flops, transcendentals=0, bytes_accessed=bytes_accessed),
    )(aqk_b, p_b)

    P_ = out[:, :B, :N].reshape(Lyr, B, L_len, E)    # bf16; no extra f32 writeback
    i = L_len // 2
    Ek, Ev = P_[:, :, :i, :], P_[:, :, i:, :]
    loss = 0.0  # train=False branch
    # TODO(synk): train=True branch (detach/concat pool slicing + ortho_penalty
    # loss on K/A/p) is not part of this inference kernel.
    return [Ek, Ev], loss, x_block


# ----------------- deterministic parameter init (glue, plain JAX) -----------------
def init_coda_params(key, n_layers, pool, key_d, e_p_length, emb_d, pt):
    """Mimics tensor_prompt + gram_schmidt at task_count=0: rows [0, pt) are
    orthonormal (in their flattened feature space), remaining rows are zero."""
    def ortho_rows(k, n_rows, dim):
        v = jax.random.normal(k, (dim, n_rows), dtype=jnp.float32)
        q, _ = jnp.linalg.qr(v)           # (dim, n_rows) orthonormal columns
        return q.T                        # (n_rows, dim) orthonormal rows

    Ks, As, Ps = [], [], []
    for lk in jax.random.split(key, n_layers):
        kK, kA, kP = jax.random.split(lk, 3)
        Kmat = jnp.zeros((pool, key_d), jnp.float32).at[:pt].set(
            ortho_rows(kK, pt, key_d))
        Amat = jnp.zeros((pool, key_d), jnp.float32).at[:pt].set(
            ortho_rows(kA, pt, key_d))
        Pfl = jnp.zeros((pool, e_p_length * emb_d), jnp.float32).at[:pt].set(
            ortho_rows(kP, pt, e_p_length * emb_d))
        Ks.append(Kmat); As.append(Amat); Ps.append(Pfl.reshape(pool, e_p_length, emb_d))
    return jnp.stack(Ks), jnp.stack(As), jnp.stack(Ps)


def ref_forward(x, K, A, p):
    """Pure-JAX f32 reference for one layer (matches the PyTorch forward)."""
    eps = 1e-12
    a_q = x[:, None, :] * A[None, :, :]
    nK = K / jnp.maximum(jnp.linalg.norm(K, axis=1, keepdims=True), eps)
    q = a_q / jnp.maximum(jnp.linalg.norm(a_q, axis=2, keepdims=True), eps)
    aqk = jnp.einsum("bkd,kd->bk", q, nK)
    P_ = jnp.einsum("bk,kld->bld", aqk, p)
    i = p.shape[1] // 2
    return P_[:, :i, :], P_[:, i:, :]


if __name__ == "__main__":
    # Small config consistent with the module: emb_d=32, key_dim=32, pool=8,
    # prompt length=8, n_tasks=2 -> pt=4, task_count=0 -> f=4 active prompts,
    # e_layers = [0,1,2,3,4] fused into one kernel launch.
    emb_d, key_d = 32, 32
    e_pool_size, e_p_length, n_tasks = 8, 8, 2
    e_layers = [0, 1, 2, 3, 4]
    task_count = 0
    pt = e_pool_size // n_tasks
    f = (task_count + 1) * pt
    B = 2

    key = jax.random.PRNGKey(0)
    kparam, kx, kblk = jax.random.split(key, 3)
    K_all, A_all, P_all = init_coda_params(kparam, len(e_layers), e_pool_size,
                                           key_d, e_p_length, emb_d, pt)

    x_querry = jax.random.normal(kx, (B, key_d), dtype=jnp.float32)
    x_block = jax.random.normal(kblk, (B, 8, emb_d), dtype=jnp.float32)

    # eval-mode slicing: K[0:f], A[0:f], p[0:f] per layer
    K_e, A_e, P_e = K_all[:, :f], A_all[:, :f], P_all[:, :f]

    # Parameter-only prep runs ONCE (cached across forward calls).
    prepared = prepare_coda_inference(K_e, A_e, P_e)              # single tile/layer
    (Ek_all, Ev_all), loss, x_blk_out = coda_prompt_forward(x_querry, prepared, x_block)
    jax.block_until_ready((Ek_all, Ev_all))

    # Multi-tile variant exercising the pipelined (layer, tile) grid.
    prepared_mt = prepare_coda_inference(K_e, A_e, P_e, tn=128)   # grid=(5, 2)
    (Ek_mt, Ev_mt), _, _ = coda_prompt_forward(x_querry, prepared_mt, x_block)
    jax.block_until_ready((Ek_mt, Ev_mt))

    i = e_p_length // 2
    assert Ek_all.shape == (len(e_layers), B, i, emb_d)
    assert Ev_all.shape == (len(e_layers), B, i, emb_d)
    for li, l in enumerate(e_layers):
        Ek_ref, Ev_ref = ref_forward(x_querry, K_e[li], A_e[li], P_e[li])
        # bf16 prompt pool / aq_k / output (f32 accumulation) -> loose tolerance.
        assert jnp.allclose(Ek_all[li].astype(jnp.float32), Ek_ref, atol=2e-2, rtol=2e-2)
        assert jnp.allclose(Ev_all[li].astype(jnp.float32), Ev_ref, atol=2e-2, rtol=2e-2)
        assert jnp.allclose(Ek_mt[li].astype(jnp.float32), Ek_ref, atol=2e-2, rtol=2e-2)
        assert jnp.allclose(Ev_mt[li].astype(jnp.float32), Ev_ref, atol=2e-2, rtol=2e-2)
    print("KERNEL_OK")
</pallas_src>

<mosaic_0001>
module attributes {stable_mosaic.version = 11 : i64} {
  func.func @coda_prompt_kernel(%arg0: i32, %arg1: i32, %arg2: memref<1x8x8xbf16, #tpu.memory_space<vmem>>, %arg3: memref<1x8x256xbf16, #tpu.memory_space<vmem>>, %arg4: memref<1x8x256xbf16, #tpu.memory_space<vmem>>) attributes {dimension_semantics = [#tpu.dimension_semantics<parallel>, #tpu.dimension_semantics<parallel>], iteration_bounds = array<i64: 5, 1>, scalar_prefetch = 0 : i64, scratch_operands = 0 : i64, tpu.core_type = #tpu.core_type<tc>, window_params = [{transform_indices = @transform_0, window_bounds = array<i64: 1, 8, 8>}, {transform_indices = @transform_1, window_bounds = array<i64: 1, 8, 256>}, {transform_indices = @transform_2, window_bounds = array<i64: 1, 8, 256>}]} {
    %c0 = arith.constant 0 : index
    %c0_0 = arith.constant 0 : index
    %c0_1 = arith.constant 0 : index
    %0 = vector.load %arg2[%c0, %c0_0, %c0_1] : memref<1x8x8xbf16, #tpu.memory_space<vmem>>, vector<1x8x8xbf16>
    %1 = vector.shape_cast %0 : vector<1x8x8xbf16> to vector<8x8xbf16>
    %c0_2 = arith.constant 0 : index
    %c0_3 = arith.constant 0 : index
    %c0_4 = arith.constant 0 : index
    %2 = vector.load %arg3[%c0_2, %c0_3, %c0_4] : memref<1x8x256xbf16, #tpu.memory_space<vmem>>, vector<1x8x256xbf16>
    %3 = vector.shape_cast %2 : vector<1x8x256xbf16> to vector<8x256xbf16>
    %cst = arith.constant dense<0.000000e+00> : vector<8x256xf32>
    %4 = tpu.matmul %1, %3, %cst {dimension_numbers = #tpu.dot_dimension_numbers<[1], [0], [0], [1], [0, 0, 1, 1], [], []>} : vector<8x8xbf16>, vector<8x256xbf16>, vector<8x256xf32> -> vector<8x256xf32>
    %5 = arith.truncf %4 : vector<8x256xf32> to vector<8x256xbf16>
    %c0_5 = arith.constant 0 : index
    %c0_6 = arith.constant 0 : index
    %c0_7 = arith.constant 0 : index
    %6 = vector.load %arg4[%c0_5, %c0_6, %c0_7] : memref<1x8x256xbf16, #tpu.memory_space<vmem>>, vector<1x8x256xbf16>
    %7 = vector.shape_cast %6 : vector<1x8x256xbf16> to vector<8x256xbf16>
    %8 = vector.shape_cast %5 : vector<8x256xbf16> to vector<1x8x256xbf16>
    tpu.vector_store %arg4[%c0_5, %c0_6, %c0_7], %8 {strides = array<i32>} : memref<1x8x256xbf16, #tpu.memory_space<vmem>>, vector<1x8x256xbf16>,
    return
  }
  func.func @transform_0(%arg0: i32, %arg1: i32) -> (i32, i32, i32) {
    %c0_i32 = arith.constant 0 : i32
    %c0_i32_0 = arith.constant 0 : i32
    %c0_i32_1 = arith.constant 0 : i32
    return %arg0, %c0_i32, %c0_i32_0 : i32, i32, i32
  }
  func.func @transform_1(%arg0: i32, %arg1: i32) -> (i32, i32, i32) {
    %c0_i32 = arith.constant 0 : i32
    %c0_i32_0 = arith.constant 0 : i32
    return %arg0, %c0_i32, %arg1 : i32, i32, i32
  }
  func.func @transform_2(%arg0: i32, %arg1: i32) -> (i32, i32, i32) {
    %c0_i32 = arith.constant 0 : i32
    %c0_i32_0 = arith.constant 0 : i32
    return %arg0, %c0_i32, %arg1 : i32, i32, i32
  }
}

</mosaic_0001>

<llo_original>
// kernel: tpu_custom_call.1
$region0: #{tpu_custom_call.1}
  #allocation0 [shape = 'u32[]', space=smem, size = 0x4, offset = 0x4, fixed_abs, tag = 'smem constant byte address 0x4 - core index']
  #allocation1 [shape = 'u32[144,128]{1,0:T(1,128)}', space=vmem, size = 0x12000, scoped, tag = 'internal scratch']
  %s0 = inlined_call_operand.hbm [shape: bf16[5,8,8], index: 0, kind: input, shape index: {}]
  %s1 = inlined_call_operand.hbm [shape: bf16[5,8,256], index: 1, kind: input, shape index: {}]
  %s2 = inlined_call_operand.hbm [shape: bf16[5,8,256], index: 2, kind: output, shape index: {}]
  %s3 = sld [smem:[#allocation0]]
  $region49: #{tpu_custom_call.1} parent=0
    _
  %s5 = ssub.s32 1, %s3
  %s6 = scalar_select 0, %s5, %s3
  $region1: #{tpu_custom_call.1} parent=0
    #allocation2 [shape = 'u8[4096]{0}', space=vmem, size = 0x1000, scoped, tag = 'input window, operand 0']
    #allocation3 [shape = 's32[2]{0}', space=sflag, size = 0x8, scoped, tag = 'scoped memory for tpu_custom_call.1']
    #allocation4 [shape = 's32[2]{0}', space=sflag, size = 0x8, scoped, tag = 'scoped memory for tpu_custom_call.1']
    #allocation5 [shape = 'u8[8192]{0}', space=vmem, size = 0x2000, scoped, tag = 'input window, operand 1']
    #allocation6 [shape = 's32[2]{0}', space=sflag, size = 0x8, scoped, tag = 'scoped memory for tpu_custom_call.1']
    #allocation7 [shape = 'u8[8192]{0}', space=vmem, size = 0x2000, scoped, tag = 'output window, operand 0']
    %7 = vsyncpa [#allocation3], 0
    %s8 = scalar_lea.sflag [#allocation3], 1
    %9 = vsyncpa %s8, 0
    %10 = vsyncpa [#allocation6], 0
    %s11 = scalar_lea.sflag [#allocation6], 1
    %12 = vsyncpa %s11, 0
    %13 = vsyncpa [#allocation4], 0
    %s14 = scalar_lea.sflag [#allocation4], 1
    %15 = vsyncpa %s14, 0
    loop: start=0, step=1, limit=7
    $region2: #{tpu_custom_call.1} parent=1 // loop_pre_header
      _
    $region3: #{tpu_custom_call.1} parent=1 // loop_header
      %s17 = sphi 0, %s21
      %p18 = scmp.ge.s32.totalorder %s17, 7
      %s24 = sphi 0, %s36
      %s25 = sphi 0, %s32
      %s26 = sphi 0, %s24
      %s27 = sphi 0, %s25
      %s28 = sphi 0, %s26
      %s29 = sphi 0, %s27
      %s39 = sphi 0, %s41
      %s42 = sphi 0, %s39
      %s43 = sphi 0, %s42
      %s59 = sphi 0, %s43
      %s67 = sphi 0, %s69
      %s70 = sphi 0, %s67
      %s71 = sphi 0, %s70
      %s87 = sphi 0, %s71
      %s95 = sphi 0, %s97
      %s98 = sphi 0, %s95
      %s99 = sphi 0, %s98
      %s115 = sphi 0, %s99
    $region4: #{tpu_custom_call.1} parent=1 // loop_header_branch
      %20 = sbr.rel (%p18) target = $region8
    $region5: #{tpu_custom_call.1} parent=1 // loop_body
      %s22 = ssub.s32 %s17, 1
      %s23 = ssub.s32 %s17, 2
      %s30 = sadd.s32 1, %s25
      %p31 = scmp.ge.s32.totalorder %s30, 1
      %s32 = scalar_select %p31, 0, %s30
      %s33 = sadd.s32 1, %s24
      %s34 = scalar_select %p31, %s33, %s24
      %p35 = scmp.ge.s32.totalorder %s34, 5
      %s36 = scalar_select %p35, 0, %s34
      %s37 = ssub.s32 %s24, %s36
      %p38 = scmp.eq.s32.totalorder %s37, 0
      %s40 = sadd.s32 %s39, 1
      %s41 = scalar_select %p38, %s39, %s40
      %p44 = pneg %p38
      %p45 = scmp.eq.s32.totalorder %s17, 4
      %p46 = por %p44, %p45
      %p47 = scmp.ne.s32.totalorder %s39, %s42
      %p48 = scmp.eq.s32.totalorder %s17, 0
      %p49 = por %p47, %p48
      %p50 = scmp.ne.s32.totalorder %s39, %s42
      %p51 = scmp.eq.s32.totalorder %s22, 4
      %p52 = por %p50, %p51
      %p53 = scmp.ne.s32.totalorder %s42, %s43
      %p54 = scmp.eq.s32.totalorder %s22, 0
      %p55 = por %p53, %p54
      %p56 = scmp.ne.s32.totalorder %s42, %s43
      %p57 = scmp.eq.s32.totalorder %s23, 4
      %p58 = por %p56, %p57
      %p60 = scmp.ne.s32.totalorder %s43, %s59
      %p61 = scmp.eq.s32.totalorder %s23, 0
      %p62 = por %p60, %p61
      %s63 = ssub.s32 %s24, %s36
      %s64 = ssub.s32 %s25, %s32
      %s65 = sor.u32 %s63, %s64
      %p66 = scmp.eq.s32.totalorder %s65, 0
      %s68 = sadd.s32 %s67, 1
      %s69 = scalar_select %p66, %s67, %s68
      %p72 = pneg %p66
      %p73 = scmp.eq.s32.totalorder %s17, 4
      %p74 = por %p72, %p73
      %p75 = scmp.ne.s32.totalorder %s67, %s70
      %p76 = scmp.eq.s32.totalorder %s17, 0
      %p77 = por %p75, %p76
      %p78 = scmp.ne.s32.totalorder %s67, %s70
      %p79 = scmp.eq.s32.totalorder %s22, 4
      %p80 = por %p78, %p79
      %p81 = scmp.ne.s32.totalorder %s70, %s71
      %p82 = scmp.eq.s32.totalorder %s22, 0
      %p83 = por %p81, %p82
      %p84 = scmp.ne.s32.totalorder %s70, %s71
      %p85 = scmp.eq.s32.totalorder %s23, 4
      %p86 = por %p84, %p85
      %p88 = scmp.ne.s32.totalorder %s71, %s87
      %p89 = scmp.eq.s32.totalorder %s23, 0
      %p90 = por %p88, %p89
      %s91 = ssub.s32 %s24, %s36
      %s92 = ssub.s32 %s25, %s32
      %s93 = sor.u32 %s91, %s92
      %p94 = scmp.eq.s32.totalorder %s93, 0
      %s96 = sadd.s32 %s95, 1
      %s97 = scalar_select %p94, %s95, %s96
      %p100 = pneg %p94
      %p101 = scmp.eq.s32.totalorder %s17, 4
      %p102 = por %p100, %p101
      %p103 = scmp.ne.s32.totalorder %s95, %s98
      %p104 = scmp.eq.s32.totalorder %s17, 0
      %p105 = por %p103, %p104
      %p106 = scmp.ne.s32.totalorder %s95, %s98
      %p107 = scmp.eq.s32.totalorder %s22, 4
      %p108 = por %p106, %p107
      %p109 = scmp.ne.s32.totalorder %s98, %s99
      %p110 = scmp.eq.s32.totalorder %s22, 0
      %p111 = por %p109, %p110
      %p112 = scmp.ne.s32.totalorder %s98, %s99
      %p113 = scmp.eq.s32.totalorder %s23, 4
      %p114 = por %p112, %p113
      %p116 = scmp.ne.s32.totalorder %s99, %s115
      %p117 = scmp.eq.s32.totalorder %s23, 0
      %p118 = por %p116, %p117
      %p119 = scmp.le.s32.totalorder 1, %s17
      %p120 = scmp.lt.s32.totalorder %s17, 6
      %p121 = pnand %p119, %p120
      %p122 = pneg %p121
      // Predicated region
      $region9: #{tpu_custom_call.1} parent=5 // pred_check
        _
      $region10: #{tpu_custom_call.1} parent=5 // pred_check_branch
        %124 = sbr.rel (%p121) target = $region12
      $region11: #{tpu_custom_call.1} parent=5 // pred_region
        %s125 = ssub.s32 %s17, 1
      $region12: #{tpu_custom_call.1} parent=5 // pred_fallthru
        _
      %p126 = scmp.lt.s32.totalorder %s17, 5
      // Predicated region
      $region13: #{tpu_custom_call.1} parent=5 // pred_check
        %p127 = pneg %p126
      $region14: #{tpu_custom_call.1} parent=5 // pred_check_branch
        %129 = sbr.rel (%p127) target = $region16
      $region15: #{tpu_custom_call.1} parent=5 // pred_region
        // Predicated region
        $region17: #{tpu_custom_call.1} parent=15 // pred_check
          %p130 = pneg %p49
        $region18: #{tpu_custom_call.1} parent=15 // pred_check_branch
          %132 = sbr.rel (%p130) target = $region20
        $region19: #{tpu_custom_call.1} parent=15 // pred_region
          %s133 = sand.u32 %s39, 1
          %s134 = scalar_lea.sflag [#allocation3], %s133
          %s135 = sand.u32 %s39, 1
          %s136 = smul.addr %s135, 4
          %s137 = scalar_lea.vmem [#allocation2], %s136
          %s139 = ssub.s32 64, 64
          %140 = vsyncadd %s134, %s139
          %s141 = smul.addr %s24, 64
          %s142 = scalar_lea.hbm %s0, %s141
          %s144 = sshll.u32 %s137, 4
          %s145 = int_to_ptr.vmem [resolvable:$true] %s144
          %147 = dma.hbm_to_vmem [thread:$0]  %s142, 64, %s145, %s134
        $region20: #{tpu_custom_call.1} parent=15 // pred_fallthru
          _
        // Predicated region
        $region21: #{tpu_custom_call.1} parent=15 // pred_check
          %p148 = pneg %p77
        $region22: #{tpu_custom_call.1} parent=15 // pred_check_branch
          %150 = sbr.rel (%p148) target = $region24
        $region23: #{tpu_custom_call.1} parent=15 // pred_region
          %s151 = sand.u32 %s67, 1
          %s152 = scalar_lea.sflag [#allocation6], %s151
          %s153 = sand.u32 %s67, 1
          %s154 = smul.addr %s153, 8
          %s155 = scalar_lea.vmem [#allocation5], %s154
          %s156 = smul.u32 2, %s25
          %s158 = ssub.s32 128, 128
          %159 = vsyncadd %s152, %s158
          %s160 = smul.addr %s24, 2
          %s161 = sadd.s32 %s156, %s160
          %s162 = smul.addr %s161, 64
          %s163 = scalar_lea.hbm %s1, %s162
          %s165 = sshll.u32 %s155, 4
          %s166 = int_to_ptr.vmem [resolvable:$true] %s165
          %168 = dma.hbm_to_vmem [thread:$0]  %s163, 128, %s166, %s152
        $region24: #{tpu_custom_call.1} parent=15 // pred_fallthru
          _
      $region16: #{tpu_custom_call.1} parent=5 // pred_fallthru
        _
      %p169 = scmp.le.s32.totalorder 1, %s17
      %p170 = scmp.lt.s32.totalorder %s17, 6
      %p171 = pnand %p169, %p170
      %p172 = pneg %p171
      // Predicated region
      $region25: #{tpu_custom_call.1} parent=5 // pred_check
        _
      $region26: #{tpu_custom_call.1} parent=5 // pred_check_branch
        %174 = sbr.rel (%p171) target = $region28
      $region27: #{tpu_custom_call.1} parent=5 // pred_region
        %s175 = ssub.s32 %s17, 1
        %s176 = sand.u32 %s42, 1
        %s177 = scalar_lea.sflag [#allocation3], %s176
        %s178 = sand.u32 %s42, 1
        %s179 = smul.addr %s178, 4
        %s180 = scalar_lea.vmem [#allocation2], %s179
        // Predicated region
        $region29: #{tpu_custom_call.1} parent=27 // pred_check
          %p181 = pneg %p55
        $region30: #{tpu_custom_call.1} parent=27 // pred_check_branch
          %183 = sbr.rel (%p181) target = $region32
        $region31: #{tpu_custom_call.1} parent=27 // pred_region
          %184 = dma.done %s177, 64
        $region32: #{tpu_custom_call.1} parent=27 // pred_fallthru
          _
        %s185 = sand.u32 %s70, 1
        %s186 = scalar_lea.sflag [#allocation6], %s185
        %s187 = sand.u32 %s70, 1
        %s188 = smul.addr %s187, 8
        %s189 = scalar_lea.vmem [#allocation5], %s188
        // Predicated region
        $region33: #{tpu_custom_call.1} parent=27 // pred_check
          %p190 = pneg %p83
        $region34: #{tpu_custom_call.1} parent=27 // pred_check_branch
          %192 = sbr.rel (%p190) target = $region36
        $region35: #{tpu_custom_call.1} parent=27 // pred_region
          %193 = dma.done %s186, 128
        $region36: #{tpu_custom_call.1} parent=27 // pred_fallthru
          _
        %s194 = sand.u32 %s42, 1
        %s195 = scalar_lea.sflag [#allocation3], %s194
        %s196 = sand.u32 %s42, 1
        %s197 = smul.addr %s196, 4
        %s198 = scalar_lea.vmem [#allocation2], %s197
        %p199 = pneg %p55
        %p200 = pneg %p52
        %s201 = sand.u32 %s70, 1
        %s202 = scalar_lea.sflag [#allocation6], %s201
        %s203 = sand.u32 %s70, 1
        %s204 = smul.addr %s203, 8
        %s205 = scalar_lea.vmem [#allocation5], %s204
        %p206 = pneg %p83
        %p207 = pneg %p80
        %p208 = pneg %p111
        %p209 = pneg %p108
        %s210 = sand.u32 %s98, 1
        %s211 = scalar_lea.sflag [#allocation4], %s210
        %s212 = sand.u32 %s98, 1
        %s213 = smul.addr %s212, 8
        %s214 = scalar_lea.vmem [#allocation7], %s213
        %s215 = smul.u32 2, %s27
        %s216 = smul.u32 2, %s27
        %v218 = vld [vmem:[%s180] sm:$0xf]
        %v219 = vld [vmem:[%s189] sm:$0xff]
        %v221 = vunpack.c.l.b16 %v219
        %v222 = vunpack.c.h.b16 %v219
        %v223 = vpack.c.b16 %v221, %v221
        %v224 = vpack.c.b16 %v222, %v222
        %vm225 = vcmask 64512
        %v227 = vsel %vm225, %v218, 0
        %vm229 = vcmask 1043456
        %v231 = vsel %vm229, %v223, 0
        %v234 = vsel %vm229, %v224, 0
        %236 = vmatprep.subr.bf16.mxu0 0
        %237 = vmatpush1.bf16.msra.mxu0 0
        %238 = vmatprep.subr.bf16.mxu0 0
        %239 = vmatpush1.bf16.msra.mxu0 0
        %240 = vmatprep.subr.bf16.mxu0 0
        %241 = vmatpush1.bf16.msra.mxu0 0
        %242 = vmatprep.subr.bf16.mxu0 0
        %243 = vmatpush1.bf16.msra.mxu0 0
        %244 = vmatprep.subr.bf16.mxu0 0
        %245 = vmatpush1.bf16.msra.mxu0 0
        %246 = vmatprep.subr.bf16.mxu0 0
        %247 = vmatpush1.bf16.msra.mxu0 0
        %248 = vmatprep.subr.bf16.mxu0 0
        %249 = vmatpush1.bf16.msra.mxu0 0
        %250 = vmatprep.subr.bf16.mxu0 %v234
        %251 = vmatpush1.bf16.msra.mxu0 %v231
        %252 = vmatprep.subr.bf16.mxu0 0
        %253 = vmatpush2.bf16.msra.mxu0 0
        %254 = vmatprep.subr.bf16.mxu0 0
        %255 = vmatpush2.bf16.msra.mxu0 0
        %256 = vmatprep.subr.bf16.mxu0 0
        %257 = vmatpush2.bf16.msra.mxu0 0
        %258 = vmatprep.subr.bf16.mxu0 0
        %259 = vmatpush2.bf16.msra.mxu0 0
        %260 = vmatprep.subr.bf16.mxu0 0
        %261 = vmatpush2.bf16.msra.mxu0 0
        %262 = vmatprep.subr.bf16.mxu0 0
        %263 = vmatpush2.bf16.msra.mxu0 0
        %264 = vmatprep.subr.bf16.mxu0 0
        %265 = vmatpush2.bf16.msra.mxu0 0
        %266 = vmatprep.subr.bf16.mxu0 0
        %267 = vmatpush2.bf16.msra.mxu0 0
        %268 = vmatprep.mubr.bf16.mxu0 0
        %269 = vmatmul.mubr.bf16.gmra.mxu0 %v227
        %v270 = vpop.f32.mrf.mxu0
        %v271 = vadd.f32 0.0, %v270
        %v272 = vpop.f32.mrf.mxu0
        %v273 = vadd.f32 0.0, %v272
        %v274 = vpop.f32.mrf.mxu0
        %v275 = vpop.f32.mrf.mxu0
        %276 = vdwg.mxu0
        %v277 = vpack.c.bf16 %v271, %v271
        %v278 = vpack.c.bf16 %v273, %v273
        %v281 = vunpack.c.l.b16 %v277
        %v282 = vunpack.c.l.b16 %v278
        %v283 = vpack.c.b16 %v282, %v281
        %285 = vst [vmem:[%s214] sm:$0xff] %v283
        %s286 = sand.u32 %s98, 1
        %s287 = scalar_lea.sflag [#allocation4], %s286
        %s288 = sand.u32 %s98, 1
        %s289 = smul.addr %s288, 8
        %s290 = scalar_lea.vmem [#allocation7], %s289
        // Predicated region
        $region37: #{tpu_custom_call.1} parent=27 // pred_check
          %p291 = pneg %p108
        $region38: #{tpu_custom_call.1} parent=27 // pred_check_branch
          %293 = sbr.rel (%p291) target = $region40
        $region39: #{tpu_custom_call.1} parent=27 // pred_region
          %s294 = smul.u32 2, %s27
          %s296 = ssub.s32 128, 128
          %297 = vsyncadd %s287, %s296
          %s298 = smul.addr %s26, 2
          %s299 = sadd.s32 %s294, %s298
          %s300 = smul.addr %s299, 64
          %s301 = scalar_lea.hbm %s2, %s300
          %s303 = sshll.u32 %s290, 4
          %s304 = int_to_ptr.vmem [resolvable:$true] %s303
          %306 = dma.vmem_to_hbm [thread:$0]  %s304, 128, %s301, %s287
        $region40: #{tpu_custom_call.1} parent=27 // pred_fallthru
          _
      $region28: #{tpu_custom_call.1} parent=5 // pred_fallthru
        _
      %p307 = scmp.le.s32.totalorder 2, %s17
      // Predicated region
      $region41: #{tpu_custom_call.1} parent=5 // pred_check
        %p308 = pneg %p307
      $region42: #{tpu_custom_call.1} parent=5 // pred_check_branch
        %310 = sbr.rel (%p308) target = $region44
      $region43: #{tpu_custom_call.1} parent=5 // pred_region
        %s311 = ssub.s32 %s17, 2
        // Predicated region
        $region45: #{tpu_custom_call.1} parent=43 // pred_check
          %p312 = pneg %p114
        $region46: #{tpu_custom_call.1} parent=43 // pred_check_branch
          %314 = sbr.rel (%p312) target = $region48
        $region47: #{tpu_custom_call.1} parent=43 // pred_region
          %s315 = sand.u32 %s99, 1
          %s316 = scalar_lea.sflag [#allocation4], %s315
          %s317 = sand.u32 %s99, 1
          %s318 = smul.addr %s317, 8
          %s319 = scalar_lea.vmem [#allocation7], %s318
          %320 = dma.done %s316, 128
        $region48: #{tpu_custom_call.1} parent=43 // pred_fallthru
          _
      $region44: #{tpu_custom_call.1} parent=5 // pred_fallthru
        _
    $region6: #{tpu_custom_call.1} parent=1 // loop_footer
      %s21 = sadd.s32 1, %s17
    $region7: #{tpu_custom_call.1} parent=1 // loop_footer_branch
      %16 = sbr.rel target = $region3
    $region8: #{tpu_custom_call.1} parent=1 // loop_exit
      _
    %321 = vsyncpa [#allocation3], 1
    %s322 = scalar_lea.sflag [#allocation3], 1
    %323 = vsyncpa %s322, 1
    %324 = vsyncpa [#allocation6], 1
    %s325 = scalar_lea.sflag [#allocation6], 1
    %326 = vsyncpa %s325, 1
    %327 = vsyncpa [#allocation4], 1
    %s328 = scalar_lea.sflag [#allocation4], 1
    %329 = vsyncpa %s328, 1

</llo_original>
